<compile_context>
chip_gen: v5e
topology: v5e:2x2
jax: 0.10.0
libtpu: 0.0.40
codegen_flags: <defaults>
</compile_context>

<pallas_src>
import jax
import jax.numpy as jnp
from jax.experimental import pallas as pl
from jax.experimental.pallas import tpu as pltpu


def _copy_kernel(x_ref, o_ref):
    # Identity: full tile load from VMEM, full tile store back.
    o_ref[...] = x_ref[...]


_LANE_CANDIDATES = (4096, 2048, 1024, 512, 256, 128)


def _round_up(a: int, b: int) -> int:
    return ((a + b - 1) // b) * b


def _target_block_bytes() -> int:
    """Per-generation block-size target (bytes per input block)."""
    try:
        kind = jax.devices()[0].device_kind.lower()
    except Exception:
        return 2 << 20
    if "v7" in kind:
        return 8 << 20   # fast HBM: amortize the ~0.35 us/step overhead
    if "v6" in kind:
        return 4 << 20
    return 2 << 20       # v5e & older / unknown: respect 16 MiB scoped VMEM


def base_model_forward(x: jax.Array) -> jax.Array:
    """Identity forward for the abstract BaseModel via a lane-dense, tiled,
    input-aliased Pallas copy kernel. Returns an array identical to `x`."""
    orig_shape = x.shape
    orig_dtype = x.dtype
    itemsize = jnp.dtype(orig_dtype).itemsize

    flat = x.reshape(-1)
    total = flat.shape[0]

    # --- Lane-dense 2-D view -------------------------------------------------
    # Prefer the widest lane that exactly divides the element count (no pad);
    # otherwise take the widest lane not exceeding it and pad only the tail to
    # a multiple of `lane` (at most lane-1 elements).
    lane = next((l for l in _LANE_CANDIDATES if total >= l and total % l == 0), None)
    if lane is None:
        lane = next((l for l in _LANE_CANDIDATES if total >= l), 128)

    padded_total = _round_up(total, lane)
    if padded_total != total:
        flat = jnp.pad(flat, (0, padded_total - total))
    rows = padded_total // lane
    x2d = flat.reshape(rows, lane)

    # --- Row tiling ----------------------------------------------------------
    # Sublane packing granule: 8 rows for 32-bit, 16 for 16-bit, 32 for 8-bit.
    pack = max(1, 4 // itemsize)
    granule = 8 * pack

    if rows <= granule:
        # Tiny array: single full-extent block (escape hatch: block == full dim).
        block_rows = rows
    else:
        target_bytes = _target_block_bytes()
        cap = max(granule, (target_bytes // (lane * itemsize)) // granule * granule)
        # Ensure at least 2 grid steps so both TCs / DMA pipelining are used.
        half = _round_up(pl.cdiv(rows, 2), granule)
        block_rows = min(cap, half)

    grid = (pl.cdiv(rows, block_rows),)
    block_bytes = block_rows * lane * itemsize

    out2d = pl.pallas_call(
        _copy_kernel,
        out_shape=jax.ShapeDtypeStruct((rows, lane), orig_dtype),
        grid=grid,
        in_specs=[pl.BlockSpec((block_rows, lane), lambda i: (i, 0))],
        out_specs=pl.BlockSpec((block_rows, lane), lambda i: (i, 0)),
        input_output_aliases={0: 0},
        cost_estimate=pl.CostEstimate(
            flops=0,
            transcendentals=0,
            bytes_accessed=2 * rows * lane * itemsize,
        ),
        compiler_params=pltpu.CompilerParams(
            dimension_semantics=("parallel",),
            vmem_limit_bytes=int(min(48 << 20, max(32 << 20, 5 * block_bytes + (4 << 20)))),
        ),
    )(x2d)

    if padded_total == total:
        return out2d.reshape(orig_shape)
    return out2d.reshape(-1)[:total].reshape(orig_shape)


# Donate the input so input_output_aliases genuinely reuses the HBM buffer
# (without donation XLA inserts a defensive full-array copy).
base_model_forward_jit = jax.jit(base_model_forward, donate_argnums=0)


if __name__ == "__main__":
    key = jax.random.PRNGKey(0)
    # Small NCHW input consistent with an audio-spectrogram-style model.
    x = jax.random.normal(key, (2, 4, 16, 16), dtype=jnp.float32)

    # Host copy for verification: `x` is donated (its device buffer is consumed).
    x_host = jax.device_get(x)

    y = base_model_forward_jit(x)
    y = jax.block_until_ready(y)

    # Identity check (forward of BaseModel defines no transformation).
    y_host = jax.device_get(y)
    assert y_host.shape == x_host.shape and y_host.dtype == x_host.dtype
    assert bool((y_host == x_host).all())

    print("KERNEL_OK")
</pallas_src>

<mosaic_0001>
module attributes {stable_mosaic.version = 11 : i64} {
  func.func @_copy_kernel(%arg0: i32, %arg1: memref<1x2048xf32, #tpu.memory_space<vmem>>, %arg2: memref<1x2048xf32, #tpu.memory_space<vmem>>) attributes {dimension_semantics = [#tpu.dimension_semantics<parallel>], iteration_bounds = array<i64: 1>, scalar_prefetch = 0 : i64, scratch_operands = 0 : i64, tpu.core_type = #tpu.core_type<tc>, window_params = [{transform_indices = @transform_0, window_bounds = array<i64: 1, 2048>}, {transform_indices = @transform_1, window_bounds = array<i64: 1, 2048>}]} {
    %c0 = arith.constant 0 : index
    %c0_0 = arith.constant 0 : index
    %0 = vector.load %arg1[%c0, %c0_0] : memref<1x2048xf32, #tpu.memory_space<vmem>>, vector<1x2048xf32>
    %c0_1 = arith.constant 0 : index
    %c0_2 = arith.constant 0 : index
    %1 = vector.load %arg2[%c0_1, %c0_2] : memref<1x2048xf32, #tpu.memory_space<vmem>>, vector<1x2048xf32>
    tpu.vector_store %arg2[%c0_1, %c0_2], %0 {strides = array<i32>} : memref<1x2048xf32, #tpu.memory_space<vmem>>, vector<1x2048xf32>,
    return
  }
  func.func @transform_0(%arg0: i32) -> (i32, i32) {
    %c0_i32 = arith.constant 0 : i32
    %c0_i32_0 = arith.constant 0 : i32
    return %arg0, %c0_i32 : i32, i32
  }
  func.func @transform_1(%arg0: i32) -> (i32, i32) {
    %c0_i32 = arith.constant 0 : i32
    %c0_i32_0 = arith.constant 0 : i32
    return %arg0, %c0_i32 : i32, i32
  }
}

</mosaic_0001>

<llo_original>
// kernel: base_model_forward.1
$region0: #{base_model_forward.1}
  #allocation0 [shape = 'u32[]', space=smem, size = 0x4, offset = 0x4, fixed_abs, tag = 'smem constant byte address 0x4 - core index']
  #allocation1 [shape = 'u32[72,128]{1,0:T(1,128)}', space=vmem, size = 0x9000, scoped, tag = 'internal scratch']
  %s0 = inlined_call_operand.vmem [shape: f32[1,2048], index: 0, kind: input, shape index: {}, may-alias: {0,1}]
  %s1 = inlined_call_operand.vmem [shape: f32[1,2048], index: 1, kind: output, shape index: {}, may-alias: {0,1}]
  %s2 = sld [smem:[#allocation0]]
  $region14: #{base_model_forward.1} parent=0
    _
  %s4 = ssub.s32 1, %s2
  %s5 = scalar_select 0, %s4, %s2
  // Predicated region
  $region2: #{base_model_forward.1} parent=0 // pred_check
    _
  $region3: #{base_model_forward.1} parent=0 // pred_check_branch
    %7 = sbr.rel (0) target = $region5
  $region4: #{base_model_forward.1} parent=0 // pred_region
    _
  $region5: #{base_model_forward.1} parent=0 // pred_fallthru
    _
  %v8 = vld [vmem:[%s0] sm:$0xff]
  %v9 = vld [vmem:[%s0 + $0x8] sm:$0xff]
  %10 = vst [vmem:[%s1] sm:$0xff] %v8
  %11 = vst [vmem:[%s1 + $0x8] sm:$0xff] %v9
  // Predicated region
  $region6: #{base_model_forward.1} parent=0 // pred_check
    _
  $region7: #{base_model_forward.1} parent=0 // pred_check_branch
    %13 = sbr.rel (0) target = $region9
  $region8: #{base_model_forward.1} parent=0 // pred_region
    _
  $region9: #{base_model_forward.1} parent=0 // pred_fallthru
    _
  // Predicated region
  $region10: #{base_model_forward.1} parent=0 // pred_check
    _
  $region11: #{base_model_forward.1} parent=0 // pred_check_branch
    %15 = sbr.rel (0) target = $region13
  $region12: #{base_model_forward.1} parent=0 // pred_region
    _
  $region13: #{base_model_forward.1} parent=0 // pred_fallthru
    _

</llo_original>
